<compile_context>
chip_gen: v5e
topology: v5e:2x2
jax: 0.10.0
libtpu: 0.0.40
codegen_flags: <defaults>
</compile_context>

<pallas_src>
from functools import partial

import jax
import jax.numpy as jnp
from jax.experimental import pallas as pl
from jax.experimental.pallas import tpu as pltpu

MULTIPLIER = 5.0   # module default: multiplier=5
LIMIT = True       # module default: limit=True

_LANE = 128
_SUBLANE = 8
_PACK = _LANE * _SUBLANE  # 1024 elements = one f32 vreg


def _sin_kernel(x_ref, o_ref):
    x = x_ref[...]
    # Multiply / clip in the native dtype (weak python floats keep bf16/f16).
    if MULTIPLIER is not None:
        x = x * MULTIPLIER
    if LIMIT:
        x = jnp.clip(x, -60.0, 60.0)
    # sin has no EUP path on TPU -> VPU polynomial; evaluate it in f32 for
    # narrow floats (matches torch, which computes narrow-dtype sin via f32).
    if jnp.issubdtype(x.dtype, jnp.floating) and jnp.finfo(x.dtype).bits < 32:
        x = x.astype(jnp.float32)
    o_ref[...] = jnp.sin(x).astype(o_ref.dtype)


def _chip_info():
    """Return (vmem_capacity_bytes, tensorcores_per_chip) with safe fallbacks."""
    vmem = 64 * 1024 * 1024  # smallest per-TC VMEM among v5e/v6e/v7x
    cores = 2                # assume 2 TCs (v7x / megacore); harmless on 1-TC chips
    try:
        info = pltpu.get_tpu_info()
        vmem = int(getattr(info, "vmem_capacity_bytes", vmem))
        for attr in ("num_cores", "tensor_cores_per_chip", "core_count"):
            val = getattr(info, attr, None)
            if val:
                cores = int(val)
                break
    except Exception:
        pass
    return vmem, cores


def _pick_tile_2d(rows, cols, itemsize, block_bytes, num_cores):
    """Row tile (multiple of 8 or full extent) targeting ~block_bytes, balanced."""
    bytes_per_row = cols * itemsize
    target_rows = max(
        _SUBLANE, (block_bytes // bytes_per_row) // _SUBLANE * _SUBLANE
    )
    if rows <= target_rows:
        # Whole slab fits one block; split in two only if >1 TC can use it.
        if num_cores > 1 and rows >= 2 * _SUBLANE and rows % _SUBLANE == 0:
            return pl.cdiv(rows // 2, _SUBLANE) * _SUBLANE
        return rows  # single full-extent block (legal even if rows % 8 != 0)
    nblk = pl.cdiv(rows, target_rows)
    if num_cores > 1 and nblk < 8 and nblk % num_cores:
        nblk = pl.cdiv(nblk, num_cores) * num_cores  # even split across TCs
    return pl.cdiv(pl.cdiv(rows, nblk), _SUBLANE) * _SUBLANE  # balanced blocks


def _pick_block_1d(n, itemsize, block_bytes, num_cores):
    """Element block (multiple of 1024 or full extent) for the flat 1-D path."""
    target = max(_PACK, (block_bytes // itemsize) // _PACK * _PACK)
    if n <= target:
        if num_cores > 1 and n >= 2 * _PACK:
            return pl.cdiv(pl.cdiv(n, 2), _PACK) * _PACK  # 2 steps for 2 TCs
        return n  # single full-extent block (legal for any n)
    nblk = pl.cdiv(n, target)
    if num_cores > 1 and nblk < 8 and nblk % num_cores:
        nblk = pl.cdiv(nblk, num_cores) * num_cores
    return pl.cdiv(pl.cdiv(n, nblk), _PACK) * _PACK


@partial(jax.jit, static_argnames=("target_block_bytes",))
def sin_pallas(x, *, target_block_bytes=4 * 1024 * 1024):
    """Elementwise sin(clamp(5*x, -60, 60)) via a tiled Pallas TPU kernel."""
    orig_shape = x.shape
    dtype = x.dtype
    n = x.size
    itemsize = jnp.dtype(dtype).itemsize

    vmem_bytes, num_cores = _chip_info()
    # Keep double-buffered (in + out) blocks plus Mosaic scratch comfortably
    # inside the smallest VMEM (v7x: 64 MiB physical / 32 MiB scoped default).
    block_bytes = max(_PACK * itemsize, min(target_block_bytes, vmem_bytes // 8))
    vmem_limit = int(min(vmem_bytes, max(32 * 1024 * 1024, 6 * block_bytes)))

    cost = pl.CostEstimate(
        flops=3 * n, transcendentals=n, bytes_accessed=2 * n * itemsize
    )
    cparams = pltpu.CompilerParams(
        dimension_semantics=("parallel",),
        vmem_limit_bytes=vmem_limit,
    )

    flat = x.reshape(-1)

    if n % _LANE == 0:
        # Fast path: widest lane-dense 2-D slab that divides n exactly.
        cols = next(c for c in (1024, 512, 256, 128) if n % c == 0)
        rows = n // cols
        tile = _pick_tile_2d(rows, cols, itemsize, block_bytes, num_cores)
        grid = (pl.cdiv(rows, tile),)
        out = pl.pallas_call(
            _sin_kernel,
            out_shape=jax.ShapeDtypeStruct((rows, cols), dtype),
            grid_spec=pltpu.PrefetchScalarGridSpec(
                num_scalar_prefetch=0,
                grid=grid,
                in_specs=[pl.BlockSpec((tile, cols), lambda i: (i, 0))],
                out_specs=pl.BlockSpec((tile, cols), lambda i: (i, 0)),
            ),
            compiler_params=cparams,
            cost_estimate=cost,
        )(flat.reshape(rows, cols))
        return out.reshape(orig_shape)

    # Awkward sizes (n % 128 != 0): stay flat 1-D, lane-aligned blocks, cdiv
    # grid -> only the final block is masked. No pad, no output slice.
    blk = _pick_block_1d(n, itemsize, block_bytes, num_cores)
    grid = (pl.cdiv(n, blk),)
    out = pl.pallas_call(
        _sin_kernel,
        out_shape=jax.ShapeDtypeStruct((n,), dtype),
        grid_spec=pltpu.PrefetchScalarGridSpec(
            num_scalar_prefetch=0,
            grid=grid,
            in_specs=[pl.BlockSpec((blk,), lambda i: (i,))],
            out_specs=pl.BlockSpec((blk,), lambda i: (i,)),
        ),
        compiler_params=cparams,
        cost_estimate=cost,
    )(flat)
    return out.reshape(orig_shape)


def _reference(x):
    y = MULTIPLIER * x
    y = jnp.clip(y, -60.0, 60.0)
    return jnp.sin(y)


if __name__ == "__main__":
    key = jax.random.PRNGKey(0)
    k0, k1, k2 = jax.random.split(key, 3)

    # Primary test: NCHW input consistent with the module (2-D fast path).
    x = jax.random.normal(k0, (2, 4, 16, 16), dtype=jnp.float32) * 20.0
    out = sin_pallas(x)
    jax.block_until_ready(out)
    assert out.shape == x.shape and out.dtype == x.dtype
    assert jnp.allclose(out, _reference(x), atol=1e-5, rtol=1e-5), "mismatch (2-D path)"

    # Small awkward shape (n < 1024, not a multiple of 128): single 1-D block.
    x2 = jax.random.normal(k1, (3, 5, 7), dtype=jnp.float32) * 20.0
    out2 = sin_pallas(x2)
    jax.block_until_ready(out2)
    assert out2.shape == x2.shape
    assert jnp.allclose(out2, _reference(x2), atol=1e-5, rtol=1e-5), "mismatch (1-D small)"

    # Larger awkward shape (n > 1024, not a multiple of 128): masked-tail 1-D path.
    x3 = jax.random.normal(k2, (3, 25, 33), dtype=jnp.float32) * 20.0
    out3 = sin_pallas(x3)
    jax.block_until_ready(out3)
    assert out3.shape == x3.shape
    assert jnp.allclose(out3, _reference(x3), atol=1e-5, rtol=1e-5), "mismatch (1-D masked tail)"

    print("KERNEL_OK")
</pallas_src>

<mosaic_0001>
module attributes {stable_mosaic.version = 11 : i64} {
  func.func @_sin_kernel(%arg0: i32, %arg1: memref<2x1024xf32, #tpu.memory_space<vmem>>, %arg2: memref<2x1024xf32, #tpu.memory_space<vmem>>) attributes {dimension_semantics = [#tpu.dimension_semantics<parallel>], iteration_bounds = array<i64: 1>, scalar_prefetch = 0 : i64, scratch_operands = 0 : i64, tpu.core_type = #tpu.core_type<tc>, window_params = [{transform_indices = @transform_0, window_bounds = array<i64: 2, 1024>}, {transform_indices = @transform_1, window_bounds = array<i64: 2, 1024>}]} {
    %c0 = arith.constant 0 : index
    %c0_0 = arith.constant 0 : index
    %0 = vector.load %arg1[%c0, %c0_0] : memref<2x1024xf32, #tpu.memory_space<vmem>>, vector<2x1024xf32>
    %cst = arith.constant 5.000000e+00 : f32
    %1 = vector.broadcast %cst : f32 to vector<2x1024xf32>
    %2 = arith.mulf %0, %1 : vector<2x1024xf32>
    %cst_1 = arith.constant -6.000000e+01 : f32
    %cst_2 = arith.constant 6.000000e+01 : f32
    %3 = vector.broadcast %cst_1 : f32 to vector<2x1024xf32>
    %4 = arith.maximumf %3, %2 : vector<2x1024xf32>
    %5 = vector.broadcast %cst_2 : f32 to vector<2x1024xf32>
    %6 = arith.minimumf %5, %4 : vector<2x1024xf32>
    %7 = math.sin %6 : vector<2x1024xf32>
    %c0_3 = arith.constant 0 : index
    %c0_4 = arith.constant 0 : index
    %8 = vector.load %arg2[%c0_3, %c0_4] : memref<2x1024xf32, #tpu.memory_space<vmem>>, vector<2x1024xf32>
    tpu.vector_store %arg2[%c0_3, %c0_4], %7 {strides = array<i32>} : memref<2x1024xf32, #tpu.memory_space<vmem>>, vector<2x1024xf32>,
    return
  }
  func.func @transform_0(%arg0: i32) -> (i32, i32) {
    %c0_i32 = arith.constant 0 : i32
    %c0_i32_0 = arith.constant 0 : i32
    return %arg0, %c0_i32 : i32, i32
  }
  func.func @transform_1(%arg0: i32) -> (i32, i32) {
    %c0_i32 = arith.constant 0 : i32
    %c0_i32_0 = arith.constant 0 : i32
    return %arg0, %c0_i32 : i32, i32
  }
}

</mosaic_0001>

<llo_original>
// kernel: sin_pallas.1
$region0: #{sin_pallas.1}
  #allocation0 [shape = 'u32[]', space=smem, size = 0x4, offset = 0x4, fixed_abs, tag = 'smem constant byte address 0x4 - core index']
  #allocation1 [shape = 'u32[72,128]{1,0:T(1,128)}', space=vmem, size = 0x9000, scoped, tag = 'internal scratch']
  %s0 = inlined_call_operand.vmem [shape: f32[2,1024], index: 0, kind: input, shape index: {}]
  %s1 = inlined_call_operand.vmem [shape: f32[2,1024], index: 1, kind: output, shape index: {}]
  %s2 = sld [smem:[#allocation0]]
  $region14: #{sin_pallas.1} parent=0
    _
  %s4 = ssub.s32 1, %s2
  %s5 = scalar_select 0, %s4, %s2
  // Predicated region
  $region2: #{sin_pallas.1} parent=0 // pred_check
    _
  $region3: #{sin_pallas.1} parent=0 // pred_check_branch
    %7 = sbr.rel (0) target = $region5
  $region4: #{sin_pallas.1} parent=0 // pred_region
    _
  $region5: #{sin_pallas.1} parent=0 // pred_fallthru
    _
  %v8 = vld [vmem:[%s0] sm:$0xff]
  %v9 = vld [vmem:[%s0 + $0x8] sm:$0xff]
  %v10 = vmul.f32 %v8, 5.0
  %v11 = vmul.f32 %v9, 5.0
  %v12 = vmax.f32 %v10, -60.0
  %v13 = vmax.f32 %v11, -60.0
  %v14 = vmin.f32 %v12, 60.0
  %v15 = vmin.f32 %v13, 60.0
  %v16 = vand.u32 2147483647, %v14
  %vm17 = vcmp.le.f32.partialorder %v16, 0.7853982
  %vm18 = vcmp.lt.s32.totalorder %v14, 0
  %v19 = vand.u32 %v14, 2139095040
  %v20 = vshrl.u32 %v19, 23
  %v21 = vsub.s32 %v20, 127
  %v22 = vand.u32 2147483647, %v14
  %v23 = vand.u32 %v22, 8388607
  %v24 = vor.u32 %v23, 8388608
  %v25 = vsub.s32 0, %v24
  %v26 = vadd.s32 %v21, 1
  %vm27 = vcmp.gt.s32.totalorder %v26, 0
  %v28 = vsel %vm27, %v26, 0
  %v29 = vshrl.u32 %v28, 5
  %v30 = vand.u32 %v28, 31
  %v31 = vsub.s32 32, %v30
  %v32 = vshrl.u32 683565275, %v31
  %v33 = vshll.u32 683565275, %v30
  %v34 = vshrl.u32 2475754826, %v31
  %v35 = vor.u32 %v33, %v34
  %v36 = vshll.u32 2475754826, %v30
  %v37 = vshrl.u32 2131351028, %v31
  %v38 = vor.u32 %v36, %v37
  %v39 = vshll.u32 2131351028, %v30
  %v40 = vshrl.u32 2102212464, %v31
  %v41 = vor.u32 %v39, %v40
  %v42 = vshll.u32 2102212464, %v30
  %v43 = vshrl.u32 920167782, %v31
  %v44 = vor.u32 %v42, %v43
  %v45 = vshll.u32 920167782, %v30
  %v46 = vshrl.u32 1326507024, %v31
  %v47 = vor.u32 %v45, %v46
  %vm48 = vcmp.lt.s32.totalorder %v29, 1
  %vm49 = vcmp.lt.s32.totalorder %v29, 2
  %vm50 = vcmp.lt.s32.totalorder %v29, 3
  %vm51 = vcmp.lt.s32.totalorder %v29, 4
  %v52 = vsel %vm48, %v32, %v35
  %v53 = vsel %vm51, %v41, 2102212464
  %v54 = vsel %vm50, %v38, %v53
  %v55 = vsel %vm49, %v52, %v54
  %v56 = vsel %vm48, %v35, %v38
  %v57 = vsel %vm51, %v44, 920167782
  %v58 = vsel %vm50, %v41, %v57
  %v59 = vsel %vm49, %v56, %v58
  %v60 = vsel %vm48, %v38, %v41
  %v61 = vsel %vm51, %v47, 1326507024
  %v62 = vsel %vm50, %v44, %v61
  %v63 = vsel %vm49, %v60, %v62
  %v64 = vshll.u32 %v24, 8
  %v65 = vand.u32 %v64, 65535
  %v66 = vshrl.u32 %v64, 16
  %v67 = vand.u32 %v63, 65535
  %v68 = vshrl.u32 %v63, 16
  %v69 = vmul.u32 %v65, %v67
  %v70 = vmul.u32 %v65, %v68
  %v71 = vmul.u32 %v66, %v67
  %v72 = vmul.u32 %v66, %v68
  %v73 = vshll.u32 %v70, 16
  %v74 = vshrl.u32 %v70, 16
  %v75 = vshll.u32 %v71, 16
  %v76 = vshrl.u32 %v71, 16
  %vm77 = vc.u32 %v69, %v73
  %v78 = vsel %vm77, 1, 0
  %v79 = vadd.s32 %v69, %v73
  %v80 = vadd.s32 %v72, %v78
  %vm81 = vc.u32 %v79, %v75
  %v82 = vsel %vm81, 1, 0
  %v83 = vadd.s32 %v79, %v75
  %v84 = vadd.s32 %v80, %v82
  %v85 = vadd.s32 %v84, %v74
  %v86 = vadd.s32 %v85, %v76
  %v87 = vand.u32 %v64, 65535
  %v88 = vshrl.u32 %v64, 16
  %v89 = vand.u32 %v59, 65535
  %v90 = vshrl.u32 %v59, 16
  %v91 = vmul.u32 %v87, %v89
  %v92 = vmul.u32 %v87, %v90
  %v93 = vmul.u32 %v88, %v89
  %v94 = vmul.u32 %v88, %v90
  %v95 = vshll.u32 %v92, 16
  %v96 = vshrl.u32 %v92, 16
  %v97 = vshll.u32 %v93, 16
  %v98 = vshrl.u32 %v93, 16
  %vm99 = vc.u32 %v91, %v95
  %v100 = vsel %vm99, 1, 0
  %v101 = vadd.s32 %v91, %v95
  %v102 = vadd.s32 %v94, %v100
  %vm103 = vc.u32 %v101, %v97
  %v104 = vsel %vm103, 1, 0
  %v105 = vadd.s32 %v101, %v97
  %v106 = vadd.s32 %v102, %v104
  %v107 = vadd.s32 %v106, %v96
  %v108 = vadd.s32 %v107, %v98
  %v109 = vmul.u32 %v64, %v55
  %v110 = vadd.s32 %v86, %v105
  %vm111 = vc.u32 %v86, %v105
  %v112 = vadd.s32 %v108, 1
  %v113 = vsel %vm111, %v112, %v108
  %v114 = vadd.s32 %v109, %v113
  %v115 = vadd.s32 %v114, 536870912
  %v116 = vshrl.u32 %v115, 30
  %v117 = vshll.u32 %v116, 30
  %v118 = vsub.s32 %v114, %v117
  %vm119 = vcmp.lt.s32.totalorder %v118, 0
  %v120 = vsub.s32 0, %v118
  %v121 = vsel %vm119, %v120, %v118
  %v122 = vclz %v121
  %v123 = vsub.s32 %v122, 2
  %vm124 = vcmp.gt.s32.totalorder 0, %v123
  %v125 = vsel %vm124, 0, %v123
  %v126 = vsub.s32 32, %v125
  %v127 = vshll.u32 %v118, %v125
  %v128 = vshrl.u32 %v110, %v126
  %v129 = vor.u32 %v127, %v128
  %v130 = vsub.s32 4294967266, %v125
  %v131 = vadd.s32 %v130, 127
  %v132 = vshll.u32 %v131, 23
  %v133 = vor.u32 4788187, %v132
  %v134 = vand.u32 2147483647, %v133
  %v136 = vcvt.s32.f32 %v129
  %v137 = vmul.f32 %v136, %v134
  %v138 = vxor.u32 %v137, 2147483648
  %v139 = vsel %vm18, %v138, %v137
  %v140 = vsub.s32 4, %v116
  %v141 = vsel %vm18, %v140, %v116
  %v142 = vsel %vm17, %v14, %v139
  %v143 = vsel %vm17, 0, %v141
  %v144 = vmul.f32 %v142, %v142
  %v145 = vmul.f32 %v144, -0.001358992
  %v146 = vadd.f32 %v145, 0.041655596
  %v147 = vmul.f32 %v144, %v146
  %v148 = vadd.f32 %v147, -0.4999988
  %v149 = vmul.f32 %v144, %v148
  %v150 = vadd.f32 1.0, %v149
  %v151 = vmul.f32 %v142, %v142
  %v152 = vmul.f32 %v151, -0.00019511016
  %v153 = vadd.f32 %v152, 0.008332121
  %v154 = vmul.f32 %v151, %v153
  %v155 = vadd.f32 %v154, -0.16666654
  %v156 = vmul.f32 %v151, %v155
  %v157 = vadd.f32 %v156, 1.0
  %v158 = vmul.f32 %v157, %v142
  %vm159 = vweird.f32 %v14
  %v160 = vadd.s32 %v143, 3
  %v161 = vand.u32 %v160, 3
  %vm162 = vcmp.lt.s32.totalorder %v161, 2
  %vm163 = vcmp.eq.s32.totalorder %v161, 0
  %v164 = vxor.u32 %v158, 2147483648
  %v165 = vsel %vm163, %v150, %v164
  %vm166 = vcmp.eq.s32.totalorder %v161, 2
  %v167 = vxor.u32 %v150, 2147483648
  %v168 = vsel %vm166, %v167, %v158
  %v169 = vsel %vm162, %v165, %v168
  %v170 = vsel %vm159, nan, %v169
  %v171 = vand.u32 2147483647, %v15
  %vm172 = vcmp.le.f32.partialorder %v171, 0.7853982
  %vm173 = vcmp.lt.s32.totalorder %v15, 0
  %v174 = vand.u32 %v15, 2139095040
  %v175 = vshrl.u32 %v174, 23
  %v176 = vsub.s32 %v175, 127
  %v177 = vand.u32 2147483647, %v15
  %v178 = vand.u32 %v177, 8388607
  %v179 = vor.u32 %v178, 8388608
  %v180 = vsub.s32 0, %v179
  %v181 = vadd.s32 %v176, 1
  %vm182 = vcmp.gt.s32.totalorder %v181, 0
  %v183 = vsel %vm182, %v181, 0
  %v184 = vshrl.u32 %v183, 5
  %v185 = vand.u32 %v183, 31
  %v186 = vsub.s32 32, %v185
  %v187 = vshrl.u32 683565275, %v186
  %v188 = vshll.u32 683565275, %v185
  %v189 = vshrl.u32 2475754826, %v186
  %v190 = vor.u32 %v188, %v189
  %v191 = vshll.u32 2475754826, %v185
  %v192 = vshrl.u32 2131351028, %v186
  %v193 = vor.u32 %v191, %v192
  %v194 = vshll.u32 2131351028, %v185
  %v195 = vshrl.u32 2102212464, %v186
  %v196 = vor.u32 %v194, %v195
  %v197 = vshll.u32 2102212464, %v185
  %v198 = vshrl.u32 920167782, %v186
  %v199 = vor.u32 %v197, %v198
  %v200 = vshll.u32 920167782, %v185
  %v201 = vshrl.u32 1326507024, %v186
  %v202 = vor.u32 %v200, %v201
  %vm203 = vcmp.lt.s32.totalorder %v184, 1
  %vm204 = vcmp.lt.s32.totalorder %v184, 2
  %vm205 = vcmp.lt.s32.totalorder %v184, 3
  %vm206 = vcmp.lt.s32.totalorder %v184, 4
  %v207 = vsel %vm203, %v187, %v190
  %v208 = vsel %vm206, %v196, 2102212464
  %v209 = vsel %vm205, %v193, %v208
  %v210 = vsel %vm204, %v207, %v209
  %v211 = vsel %vm203, %v190, %v193
  %v212 = vsel %vm206, %v199, 920167782
  %v213 = vsel %vm205, %v196, %v212
  %v214 = vsel %vm204, %v211, %v213
  %v215 = vsel %vm203, %v193, %v196
  %v216 = vsel %vm206, %v202, 1326507024
  %v217 = vsel %vm205, %v199, %v216
  %v218 = vsel %vm204, %v215, %v217
  %v219 = vshll.u32 %v179, 8
  %v220 = vand.u32 %v219, 65535
  %v221 = vshrl.u32 %v219, 16
  %v222 = vand.u32 %v218, 65535
  %v223 = vshrl.u32 %v218, 16
  %v224 = vmul.u32 %v220, %v222
  %v225 = vmul.u32 %v220, %v223
  %v226 = vmul.u32 %v221, %v222
  %v227 = vmul.u32 %v221, %v223
  %v228 = vshll.u32 %v225, 16
  %v229 = vshrl.u32 %v225, 16
  %v230 = vshll.u32 %v226, 16
  %v231 = vshrl.u32 %v226, 16
  %vm232 = vc.u32 %v224, %v228
  %v233 = vsel %vm232, 1, 0
  %v234 = vadd.s32 %v224, %v228
  %v235 = vadd.s32 %v227, %v233
  %vm236 = vc.u32 %v234, %v230
  %v237 = vsel %vm236, 1, 0
  %v238 = vadd.s32 %v234, %v230
  %v239 = vadd.s32 %v235, %v237
  %v240 = vadd.s32 %v239, %v229
  %v241 = vadd.s32 %v240, %v231
  %v242 = vand.u32 %v219, 65535
  %v243 = vshrl.u32 %v219, 16
  %v244 = vand.u32 %v214, 65535
  %v245 = vshrl.u32 %v214, 16
  %v246 = vmul.u32 %v242, %v244
  %v247 = vmul.u32 %v242, %v245
  %v248 = vmul.u32 %v243, %v244
  %v249 = vmul.u32 %v243, %v245
  %v250 = vshll.u32 %v247, 16
  %v251 = vshrl.u32 %v247, 16
  %v252 = vshll.u32 %v248, 16
  %v253 = vshrl.u32 %v248, 16
  %vm254 = vc.u32 %v246, %v250
  %v255 = vsel %vm254, 1, 0
  %v256 = vadd.s32 %v246, %v250
  %v257 = vadd.s32 %v249, %v255
  %vm258 = vc.u32 %v256, %v252
  %v259 = vsel %vm258, 1, 0
  %v260 = vadd.s32 %v256, %v252
  %v261 = vadd.s32 %v257, %v259
  %v262 = vadd.s32 %v261, %v251
  %v263 = vadd.s32 %v262, %v253
  %v264 = vmul.u32 %v219, %v210
  %v265 = vadd.s32 %v241, %v260
  %vm266 = vc.u32 %v241, %v260
  %v267 = vadd.s32 %v263, 1
  %v268 = vsel %vm266, %v267, %v263
  %v269 = vadd.s32 %v264, %v268
  %v270 = vadd.s32 %v269, 536870912
  %v271 = vshrl.u32 %v270, 30
  %v272 = vshll.u32 %v271, 30
  %v273 = vsub.s32 %v269, %v272
  %vm274 = vcmp.lt.s32.totalorder %v273, 0
  %v275 = vsub.s32 0, %v273
  %v276 = vsel %vm274, %v275, %v273
  %v277 = vclz %v276
  %v278 = vsub.s32 %v277, 2
  %vm279 = vcmp.gt.s32.totalorder 0, %v278
  %v280 = vsel %vm279, 0, %v278
  %v281 = vsub.s32 32, %v280
  %v282 = vshll.u32 %v273, %v280
  %v283 = vshrl.u32 %v265, %v281
  %v284 = vor.u32 %v282, %v283
  %v285 = vsub.s32 4294967266, %v280
  %v286 = vadd.s32 %v285, 127
  %v287 = vshll.u32 %v286, 23
  %v288 = vor.u32 4788187, %v287
  %v289 = vand.u32 2147483647, %v288
  %v291 = vcvt.s32.f32 %v284
  %v292 = vmul.f32 %v291, %v289
  %v293 = vxor.u32 %v292, 2147483648
  %v294 = vsel %vm173, %v293, %v292
  %v295 = vsub.s32 4, %v271
  %v296 = vsel %vm173, %v295, %v271
  %v297 = vsel %vm172, %v15, %v294
  %v298 = vsel %vm172, 0, %v296
  %v299 = vmul.f32 %v297, %v297
  %v300 = vmul.f32 %v299, -0.001358992
  %v301 = vadd.f32 %v300, 0.041655596
  %v302 = vmul.f32 %v299, %v301
  %v303 = vadd.f32 %v302, -0.4999988
  %v304 = vmul.f32 %v299, %v303
  %v305 = vadd.f32 1.0, %v304
  %v306 = vmul.f32 %v297, %v297
  %v307 = vmul.f32 %v306, -0.00019511016
  %v308 = vadd.f32 %v307, 0.008332121
  %v309 = vmul.f32 %v306, %v308
  %v310 = vadd.f32 %v309, -0.16666654
  %v311 = vmul.f32 %v306, %v310
  %v312 = vadd.f32 %v311, 1.0
  %v313 = vmul.f32 %v312, %v297
  %vm314 = vweird.f32 %v15
  %v315 = vadd.s32 %v298, 3
  %v316 = vand.u32 %v315, 3
  %vm317 = vcmp.lt.s32.totalorder %v316, 2
  %vm318 = vcmp.eq.s32.totalorder %v316, 0
  %v319 = vxor.u32 %v313, 2147483648
  %v320 = vsel %vm318, %v305, %v319
  %vm321 = vcmp.eq.s32.totalorder %v316, 2
  %v322 = vxor.u32 %v305, 2147483648
  %v323 = vsel %vm321, %v322, %v313
  %v324 = vsel %vm317, %v320, %v323
  %v325 = vsel %vm314, nan, %v324
  %326 = vst [vmem:[%s1] sm:$0xff] %v170
  %327 = vst [vmem:[%s1 + $0x8] sm:$0xff] %v325
  // Predicated region
  $region6: #{sin_pallas.1} parent=0 // pred_check
    _
  $region7: #{sin_pallas.1} parent=0 // pred_check_branch
    %329 = sbr.rel (0) target = $region9
  $region8: #{sin_pallas.1} parent=0 // pred_region
    _
  $region9: #{sin_pallas.1} parent=0 // pred_fallthru
    _
  // Predicated region
  $region10: #{sin_pallas.1} parent=0 // pred_check
    _
  $region11: #{sin_pallas.1} parent=0 // pred_check_branch
    %331 = sbr.rel (0) target = $region13
  $region12: #{sin_pallas.1} parent=0 // pred_region
    _
  $region13: #{sin_pallas.1} parent=0 // pred_fallthru
    _

</llo_original>
